<compile_context>
chip_gen: v6e
topology: v6e:2x2x1
jax: 0.10.0
libtpu: 0.0.40
codegen_flags: <defaults>
</compile_context>

<pallas_src>
import functools
import math

import jax
import jax.numpy as jnp
from jax.experimental import pallas as pl
from jax.experimental.pallas import tpu as pltpu


def noisy_linear_kernel(x_ref, w_ref, nw_ref, in_ref, on_ref, b_ref, o_ref, *,
                        mxu_dtype):
    """Computes one (tm, tn) output tile.

    x_ref : (tm, IN)    activations
    w_ref : (IN, tn)    weight, pre-transposed
    nw_ref: (IN, tn)    noisy weight, pre-transposed
    in_ref: (IN, 1)     in_noise column
    on_ref: (1, tn)     out_noise row
    b_ref : (2, tn)     stacked [bias; noisy_bias]
    o_ref : (tm, tn)    output tile
    """
    # Rank-1 factorised noise formed in-register (VPU broadcast), f32 math.
    noise = in_ref[...] * on_ref[...]                    # (IN, tn)
    eff_w = w_ref[...] + nw_ref[...] * noise             # fused effective weight
    b = b_ref[...]                                       # (2, tn)
    eff_b = b[0:1, :] + b[1:2, :] * on_ref[...]          # (1, tn) effective bias

    # Single MXU pass with f32 accumulation.
    acc = jnp.dot(x_ref[...].astype(mxu_dtype), eff_w.astype(mxu_dtype),
                  preferred_element_type=jnp.float32)    # (tm, tn) f32
    o_ref[...] = (acc + eff_b).astype(o_ref.dtype)


def noisy_linear_forward(x, w_t, nw_t, bias, noisy_bias, in_noise, out_noise,
                         *, mxu_dtype=jnp.float32, tm_pref=128, tn_pref=256):
    """Fused NoisyLinear forward.

    w_t / nw_t are stored pre-transposed as (in_features, out_features) so no
    per-call HBM transpose is paid.  `mxu_dtype` controls the dtype fed to the
    MXU (f32 = exact semantics, safe on v5e; bf16 = higher MXU throughput on
    v6e / v7x, f32 accumulation either way).
    """
    B, IN = x.shape
    IN_w, OUT = w_t.shape
    assert IN_w == IN and nw_t.shape == (IN, OUT)
    assert bias.shape == (OUT,) and noisy_bias.shape == (OUT,)
    assert in_noise.shape == (IN,) and out_noise.shape == (OUT,)

    biases = jnp.stack([bias, noisy_bias], axis=0)       # (2, OUT), tiny
    in_col = in_noise.reshape(IN, 1)
    on_row = out_noise.reshape(1, OUT)

    # Tile only when the dimension divides the preferred tile evenly;
    # otherwise keep the whole dimension (a full-extent block always satisfies
    # the (8, 128) layout constraint).
    def pick(dim, pref):
        return dim if (dim <= pref or dim % pref != 0) else pref

    tm = pick(B, tm_pref)            # batch tile (MXU rows)
    tn = pick(OUT, tn_pref)          # output-feature tile (lane-dense)
    grid = (B // tm, OUT // tn)

    kernel = functools.partial(noisy_linear_kernel, mxu_dtype=mxu_dtype)
    return pl.pallas_call(
        kernel,
        out_shape=jax.ShapeDtypeStruct((B, OUT), x.dtype),
        grid_spec=pltpu.PrefetchScalarGridSpec(
            num_scalar_prefetch=0,
            grid=grid,
            in_specs=[
                pl.BlockSpec((tm, IN), lambda i, j: (i, 0)),   # x
                pl.BlockSpec((IN, tn), lambda i, j: (0, j)),   # W^T
                pl.BlockSpec((IN, tn), lambda i, j: (0, j)),   # NW^T
                pl.BlockSpec((IN, 1), lambda i, j: (0, 0)),    # in_noise col
                pl.BlockSpec((1, tn), lambda i, j: (0, j)),    # out_noise row
                pl.BlockSpec((2, tn), lambda i, j: (0, j)),    # [bias; noisy_bias]
            ],
            out_specs=pl.BlockSpec((tm, tn), lambda i, j: (i, j)),
        ),
        compiler_params=pltpu.CompilerParams(
            dimension_semantics=("parallel", "parallel")),
    )(x, w_t, nw_t, in_col, on_row, biases)


if __name__ == "__main__":
    # Small but layout-friendly shapes: batch is 8-aligned (sublanes), the
    # feature dims are 128-aligned (lanes), so loads/stores are unmasked.
    batch = 8
    in_features = 128
    out_features = 128
    sigma0 = 0.5
    noise_std = sigma0 / math.sqrt(in_features)
    stdv = 1.0 / math.sqrt(in_features)

    key = jax.random.PRNGKey(0)
    kx, kw, kb, knw, knb, kin, kout = jax.random.split(key, 7)

    # Parameter init mirroring reset_parameters(): U(-stdv, stdv).
    x = jax.random.normal(kx, (batch, in_features), dtype=jnp.float32)
    weight = jax.random.uniform(kw, (out_features, in_features),
                                minval=-stdv, maxval=stdv, dtype=jnp.float32)
    bias = jax.random.uniform(kb, (out_features,),
                              minval=-stdv, maxval=stdv, dtype=jnp.float32)
    noisy_weight = jax.random.uniform(knw, (out_features, in_features),
                                      minval=-stdv, maxval=stdv,
                                      dtype=jnp.float32)
    noisy_bias = jax.random.uniform(knb, (out_features,),
                                    minval=-stdv, maxval=stdv,
                                    dtype=jnp.float32)

    # sample_noise(): in_noise, out_noise ~ N(0, noise_std).  The (OUT, IN)
    # noise matrix is never materialized for the kernel (rank-1 in-register).
    # TODO(synk): the in-place buffer update done by sample_noise() during
    # training is stateful; here noise is passed functionally as inputs.
    in_noise = noise_std * jax.random.normal(kin, (in_features,),
                                             dtype=jnp.float32)
    out_noise = noise_std * jax.random.normal(kout, (out_features,),
                                              dtype=jnp.float32)

    # Store the parameters pre-transposed (IN, OUT) once (parameter layout),
    # not per forward call.
    w_t = jnp.asarray(weight.T)
    nw_t = jnp.asarray(noisy_weight.T)

    # Pure-JAX reference reproducing the exact PyTorch forward math.
    noise_mat = out_noise[:, None] * in_noise[None, :]          # (OUT, IN)
    normal_y = x @ weight.T + bias
    noisy_y = x @ (noisy_weight * noise_mat).T + noisy_bias * out_noise
    ref = noisy_y + normal_y

    # 1) f32-fed MXU path (exact semantics; safe default on v5e).
    out_f32 = jax.block_until_ready(
        noisy_linear_forward(x, w_t, nw_t, bias, noisy_bias, in_noise,
                             out_noise, mxu_dtype=jnp.float32))
    assert out_f32.shape == ref.shape
    assert jnp.allclose(out_f32, ref, atol=1e-4, rtol=1e-4), \
        "f32 kernel mismatch vs reference"

    # 2) bf16-fed MXU path (recommended on v6e/v7x; f32 accumulation, f32
    #    elementwise noise math, only the dot operands are cast).
    out_bf16 = jax.block_until_ready(
        noisy_linear_forward(x, w_t, nw_t, bias, noisy_bias, in_noise,
                             out_noise, mxu_dtype=jnp.bfloat16))
    assert jnp.allclose(out_bf16, ref, atol=5e-2, rtol=5e-2), \
        "bf16 kernel mismatch vs reference"

    print("KERNEL_OK")
</pallas_src>

<mosaic_0001>
module attributes {stable_mosaic.version = 11 : i64} {
  func.func @noisy_linear_kernel(%arg0: i32, %arg1: i32, %arg2: memref<8x128xf32, #tpu.memory_space<vmem>>, %arg3: memref<128x128xf32, #tpu.memory_space<vmem>>, %arg4: memref<128x128xf32, #tpu.memory_space<vmem>>, %arg5: memref<128x1xf32, #tpu.memory_space<vmem>>, %arg6: memref<1x128xf32, #tpu.memory_space<vmem>>, %arg7: memref<2x128xf32, #tpu.memory_space<vmem>>, %arg8: memref<8x128xf32, #tpu.memory_space<vmem>>) attributes {dimension_semantics = [#tpu.dimension_semantics<parallel>, #tpu.dimension_semantics<parallel>], iteration_bounds = array<i64: 1, 1>, scalar_prefetch = 0 : i64, scratch_operands = 0 : i64, tpu.core_type = #tpu.core_type<tc>, window_params = [{transform_indices = @transform_0, window_bounds = array<i64: 8, 128>}, {transform_indices = @transform_1, window_bounds = array<i64: 128, 128>}, {transform_indices = @transform_2, window_bounds = array<i64: 128, 128>}, {pipeline_mode = #tpu.pipeline_mode<synchronous>, transform_indices = @transform_3, window_bounds = array<i64: 128, 1>}, {transform_indices = @transform_4, window_bounds = array<i64: 1, 128>}, {transform_indices = @transform_5, window_bounds = array<i64: 2, 128>}, {transform_indices = @transform_6, window_bounds = array<i64: 8, 128>}]} {
    %c0 = arith.constant 0 : index
    %c0_0 = arith.constant 0 : index
    %0 = vector.load %arg5[%c0, %c0_0] : memref<128x1xf32, #tpu.memory_space<vmem>>, vector<128x1xf32>
    %c0_1 = arith.constant 0 : index
    %c0_2 = arith.constant 0 : index
    %1 = vector.load %arg6[%c0_1, %c0_2] : memref<1x128xf32, #tpu.memory_space<vmem>>, vector<1x128xf32>
    %2 = vector.broadcast %0 : vector<128x1xf32> to vector<128x128xf32>
    %3 = vector.broadcast %1 : vector<1x128xf32> to vector<128x128xf32>
    %4 = arith.mulf %2, %3 : vector<128x128xf32>
    %c0_3 = arith.constant 0 : index
    %c0_4 = arith.constant 0 : index
    %5 = vector.load %arg3[%c0_3, %c0_4] : memref<128x128xf32, #tpu.memory_space<vmem>>, vector<128x128xf32>
    %c0_5 = arith.constant 0 : index
    %c0_6 = arith.constant 0 : index
    %6 = vector.load %arg4[%c0_5, %c0_6] : memref<128x128xf32, #tpu.memory_space<vmem>>, vector<128x128xf32>
    %7 = arith.mulf %6, %4 : vector<128x128xf32>
    %8 = arith.addf %5, %7 : vector<128x128xf32>
    %c0_7 = arith.constant 0 : index
    %c0_8 = arith.constant 0 : index
    %9 = vector.load %arg7[%c0_7, %c0_8] : memref<2x128xf32, #tpu.memory_space<vmem>>, vector<2x128xf32>
    %10 = vector.extract_strided_slice %9 {offsets = [0, 0], sizes = [1, 128], strides = [1, 1]} : vector<2x128xf32> to vector<1x128xf32>
    %11 = vector.extract_strided_slice %9 {offsets = [1, 0], sizes = [1, 128], strides = [1, 1]} : vector<2x128xf32> to vector<1x128xf32>
    %c0_9 = arith.constant 0 : index
    %c0_10 = arith.constant 0 : index
    %12 = vector.load %arg6[%c0_9, %c0_10] : memref<1x128xf32, #tpu.memory_space<vmem>>, vector<1x128xf32>
    %13 = arith.mulf %11, %12 : vector<1x128xf32>
    %14 = arith.addf %10, %13 : vector<1x128xf32>
    %c0_11 = arith.constant 0 : index
    %c0_12 = arith.constant 0 : index
    %15 = vector.load %arg2[%c0_11, %c0_12] : memref<8x128xf32, #tpu.memory_space<vmem>>, vector<8x128xf32>
    %cst = arith.constant dense<0.000000e+00> : vector<8x128xf32>
    %16 = tpu.matmul %15, %8, %cst {dimension_numbers = #tpu.dot_dimension_numbers<[1], [0], [0], [1], [0, 0, 1, 1], [], []>} : vector<8x128xf32>, vector<128x128xf32>, vector<8x128xf32> -> vector<8x128xf32>
    %17 = vector.broadcast %14 : vector<1x128xf32> to vector<8x128xf32>
    %18 = arith.addf %16, %17 : vector<8x128xf32>
    %c0_13 = arith.constant 0 : index
    %c0_14 = arith.constant 0 : index
    %19 = vector.load %arg8[%c0_13, %c0_14] : memref<8x128xf32, #tpu.memory_space<vmem>>, vector<8x128xf32>
    tpu.vector_store %arg8[%c0_13, %c0_14], %18 {strides = array<i32>} : memref<8x128xf32, #tpu.memory_space<vmem>>, vector<8x128xf32>,
    return
  }
  func.func @transform_0(%arg0: i32, %arg1: i32) -> (i32, i32) {
    %c0_i32 = arith.constant 0 : i32
    %c0_i32_0 = arith.constant 0 : i32
    return %arg0, %c0_i32 : i32, i32
  }
  func.func @transform_1(%arg0: i32, %arg1: i32) -> (i32, i32) {
    %c0_i32 = arith.constant 0 : i32
    %c0_i32_0 = arith.constant 0 : i32
    return %c0_i32, %arg1 : i32, i32
  }
  func.func @transform_2(%arg0: i32, %arg1: i32) -> (i32, i32) {
    %c0_i32 = arith.constant 0 : i32
    %c0_i32_0 = arith.constant 0 : i32
    return %c0_i32, %arg1 : i32, i32
  }
  func.func @transform_3(%arg0: i32, %arg1: i32) -> (i32, i32) {
    %c0_i32 = arith.constant 0 : i32
    %c0_i32_0 = arith.constant 0 : i32
    %c0_i32_1 = arith.constant 0 : i32
    return %c0_i32, %c0_i32_0 : i32, i32
  }
  func.func @transform_4(%arg0: i32, %arg1: i32) -> (i32, i32) {
    %c0_i32 = arith.constant 0 : i32
    %c0_i32_0 = arith.constant 0 : i32
    return %c0_i32, %arg1 : i32, i32
  }
  func.func @transform_5(%arg0: i32, %arg1: i32) -> (i32, i32) {
    %c0_i32 = arith.constant 0 : i32
    %c0_i32_0 = arith.constant 0 : i32
    return %c0_i32, %arg1 : i32, i32
  }
  func.func @transform_6(%arg0: i32, %arg1: i32) -> (i32, i32) {
    %c0_i32 = arith.constant 0 : i32
    return %arg0, %arg1 : i32, i32
  }
}

</mosaic_0001>

<llo_original>
// kernel: tpu_custom_call.1
$region0: #{tpu_custom_call.1}
  #allocation0 [shape = 'u32[]', space=smem, size = 0x4, offset = 0x4, fixed_abs, tag = 'smem constant byte address 0x4 - core index']
  #allocation1 [shape = 'u32[144,128]{1,0:T(1,128)}', space=vmem, size = 0x12000, scoped, tag = 'internal scratch']
  %s0 = inlined_call_operand.hbm [shape: f32[8,128], index: 0, kind: input, shape index: {}]
  %s1 = inlined_call_operand.vmem [shape: f32[128,128], index: 1, kind: input, shape index: {}]
  %s2 = inlined_call_operand.hbm [shape: f32[128,128], index: 2, kind: input, shape index: {}]
  %s3 = inlined_call_operand.vmem [shape: f32[128,1], index: 3, kind: input, shape index: {}]
  %s4 = inlined_call_operand.vmem [shape: f32[1,128], index: 4, kind: input, shape index: {}]
  %s5 = inlined_call_operand.vmem [shape: f32[2,128], index: 5, kind: input, shape index: {}]
  %s6 = inlined_call_operand.hbm [shape: f32[8,128], index: 6, kind: output, shape index: {}]
  %s7 = sld [smem:[#allocation0]]
  $region42: #{tpu_custom_call.1} parent=0
    _
  %s9 = ssub.s32 1, %s7
  %s10 = scalar_select 0, %s9, %s7
  $region1: #{tpu_custom_call.1} parent=0
    #allocation2 [shape = 'u8[4096]{0}', space=vmem, size = 0x1000, scoped, tag = 'input window, operand 0, single buffered']
    #allocation3 [shape = 's32[1]{0}', space=sflag, size = 0x4, scoped, tag = 'scoped memory for tpu_custom_call.1']
    #allocation4 [shape = 's32[1]{0}', space=sflag, size = 0x4, scoped, tag = 'scoped memory for tpu_custom_call.1']
    #allocation5 [shape = 'u8[65536]{0}', space=vmem, size = 0x10000, scoped, tag = 'input window, operand 2, single buffered']
    #allocation6 [shape = 's32[1]{0}', space=sflag, size = 0x4, scoped, tag = 'scoped memory for tpu_custom_call.1']
    #allocation7 [shape = 'u8[4096]{0}', space=vmem, size = 0x1000, scoped, tag = 'output window, operand 0, single buffered']
    %11 = vsyncpa [#allocation3], 0
    %12 = vsyncpa [#allocation6], 0
    %13 = vsyncpa [#allocation4], 0
    // Predicated region
    $region2: #{tpu_custom_call.1} parent=1 // pred_check
      _
    $region3: #{tpu_custom_call.1} parent=1 // pred_check_branch
      %15 = sbr.rel (0) target = $region5
    $region4: #{tpu_custom_call.1} parent=1 // pred_region
      %s17 = ssub.s32 128, 128
      %18 = vsyncadd [#allocation3], %s17
      %s20 = sshll.u32 [#allocation2], 4
      %s21 = int_to_ptr.vmem [resolvable:$true] %s20
      %23 = dma.hbm_to_vmem [thread:$0]  %s0, 128, %s21, [#allocation3]
    $region5: #{tpu_custom_call.1} parent=1 // pred_fallthru
      _
    // Predicated region
    $region6: #{tpu_custom_call.1} parent=1 // pred_check
      _
    $region7: #{tpu_custom_call.1} parent=1 // pred_check_branch
      %25 = sbr.rel (0) target = $region9
    $region8: #{tpu_custom_call.1} parent=1 // pred_region
      _
    $region9: #{tpu_custom_call.1} parent=1 // pred_fallthru
      _
    // Predicated region
    $region10: #{tpu_custom_call.1} parent=1 // pred_check
      _
    $region11: #{tpu_custom_call.1} parent=1 // pred_check_branch
      %27 = sbr.rel (0) target = $region13
    $region12: #{tpu_custom_call.1} parent=1 // pred_region
      %s29 = ssub.s32 2048, 2048
      %30 = vsyncadd [#allocation6], %s29
      %s31 = sshll.u32 [#allocation5], 4
      %s32 = int_to_ptr.vmem [resolvable:$true] %s31
      %37 = dma.hbm_to_vmem [thread:$0]  %s2, 2048, %s32, [#allocation6], 128, 128, 8
    $region13: #{tpu_custom_call.1} parent=1 // pred_fallthru
      _
    // Predicated region
    $region14: #{tpu_custom_call.1} parent=1 // pred_check
      _
    $region15: #{tpu_custom_call.1} parent=1 // pred_check_branch
      %39 = sbr.rel (0) target = $region17
    $region16: #{tpu_custom_call.1} parent=1 // pred_region
      _
    $region17: #{tpu_custom_call.1} parent=1 // pred_fallthru
      _
    // Predicated region
    $region18: #{tpu_custom_call.1} parent=1 // pred_check
      _
    $region19: #{tpu_custom_call.1} parent=1 // pred_check_branch
      %41 = sbr.rel (0) target = $region21
    $region20: #{tpu_custom_call.1} parent=1 // pred_region
      _
    $region21: #{tpu_custom_call.1} parent=1 // pred_fallthru
      _
    // Predicated region
    $region22: #{tpu_custom_call.1} parent=1 // pred_check
      _
    $region23: #{tpu_custom_call.1} parent=1 // pred_check_branch
      %43 = sbr.rel (0) target = $region25
    $region24: #{tpu_custom_call.1} parent=1 // pred_region
      _
    $region25: #{tpu_custom_call.1} parent=1 // pred_fallthru
      _
    // Predicated region
    $region26: #{tpu_custom_call.1} parent=1 // pred_check
      _
    $region27: #{tpu_custom_call.1} parent=1 // pred_check_branch
      %45 = sbr.rel (0) target = $region29
    $region28: #{tpu_custom_call.1} parent=1 // pred_region
      %46 = dma.done [#allocation3], 128
    $region29: #{tpu_custom_call.1} parent=1 // pred_fallthru
      _
    // Predicated region
    $region30: #{tpu_custom_call.1} parent=1 // pred_check
      _
    $region31: #{tpu_custom_call.1} parent=1 // pred_check_branch
      %48 = sbr.rel (0) target = $region33
    $region32: #{tpu_custom_call.1} parent=1 // pred_region
      %49 = dma.done [#allocation6], 2048
    $region33: #{tpu_custom_call.1} parent=1 // pred_fallthru
      _
    %v50 = vld [vmem:[%s3] sm:$0xff]
    %v51 = vld [vmem:[%s3 + $0x8] sm:$0xff]
    %v52 = vld [vmem:[%s3 + $0x10] sm:$0xff]
    %v53 = vld [vmem:[%s3 + $0x18] sm:$0xff]
    %v54 = vld [vmem:[%s3 + $0x20] sm:$0xff]
    %v55 = vld [vmem:[%s3 + $0x28] sm:$0xff]
    %v56 = vld [vmem:[%s3 + $0x30] sm:$0xff]
    %v57 = vld [vmem:[%s3 + $0x38] sm:$0xff]
    %v58 = vld [vmem:[%s3 + $0x40] sm:$0xff]
    %v59 = vld [vmem:[%s3 + $0x48] sm:$0xff]
    %v60 = vld [vmem:[%s3 + $0x50] sm:$0xff]
    %v61 = vld [vmem:[%s3 + $0x58] sm:$0xff]
    %v62 = vld [vmem:[%s3 + $0x60] sm:$0xff]
    %v63 = vld [vmem:[%s3 + $0x68] sm:$0xff]
    %v64 = vld [vmem:[%s3 + $0x70] sm:$0xff]
    %v65 = vld [vmem:[%s3 + $0x78] sm:$0xff]
    %v66 = vld [vmem:[%s4] sm:$0x1]
    %68 = vset.pattern.permute.xlu0 0
    %69 = vperm.xlu0 %68, %v50
    %v70 = vpop.permute.xlu0 %69
    %73 = vset.pattern.permute.xlu0 0
    %74 = vperm.xlu0 %73, %v51
    %v75 = vpop.permute.xlu0 %74
    %78 = vset.pattern.permute.xlu0 0
    %79 = vperm.xlu0 %78, %v52
    %v80 = vpop.permute.xlu0 %79
    %83 = vset.pattern.permute.xlu0 0
    %84 = vperm.xlu0 %83, %v53
    %v85 = vpop.permute.xlu0 %84
    %88 = vset.pattern.permute.xlu0 0
    %89 = vperm.xlu0 %88, %v54
    %v90 = vpop.permute.xlu0 %89
    %93 = vset.pattern.permute.xlu0 0
    %94 = vperm.xlu0 %93, %v55
    %v95 = vpop.permute.xlu0 %94
    %98 = vset.pattern.permute.xlu0 0
    %99 = vperm.xlu0 %98, %v56
    %v100 = vpop.permute.xlu0 %99
    %103 = vset.pattern.permute.xlu0 0
    %104 = vperm.xlu0 %103, %v57
    %v105 = vpop.permute.xlu0 %104
    %108 = vset.pattern.permute.xlu0 0
    %109 = vperm.xlu0 %108, %v58
    %v110 = vpop.permute.xlu0 %109
    %113 = vset.pattern.permute.xlu0 0
    %114 = vperm.xlu0 %113, %v59
    %v115 = vpop.permute.xlu0 %114
    %118 = vset.pattern.permute.xlu0 0
    %119 = vperm.xlu0 %118, %v60
    %v120 = vpop.permute.xlu0 %119
    %123 = vset.pattern.permute.xlu0 0
    %124 = vperm.xlu0 %123, %v61
    %v125 = vpop.permute.xlu0 %124
    %128 = vset.pattern.permute.xlu0 0
    %129 = vperm.xlu0 %128, %v62
    %v130 = vpop.permute.xlu0 %129
    %133 = vset.pattern.permute.xlu0 0
    %134 = vperm.xlu0 %133, %v63
    %v135 = vpop.permute.xlu0 %134
    %138 = vset.pattern.permute.xlu0 0
    %139 = vperm.xlu0 %138, %v64
    %v140 = vpop.permute.xlu0 %139
    %143 = vset.pattern.permute.xlu0 0
    %144 = vperm.xlu0 %143, %v65
    %v145 = vpop.permute.xlu0 %144
    %v148 = vlaneseq
    %v149 = vshrl.u32 %v148, 7
    %v150 = vsub.s32 0, %v149
    %v151 = vrot.slane %v66, %v150
    %v153 = vmul.f32 %v70, %v151
    %v154 = vmul.f32 %v75, %v151
    %v155 = vmul.f32 %v80, %v151
    %v156 = vmul.f32 %v85, %v151
    %v157 = vmul.f32 %v90, %v151
    %v158 = vmul.f32 %v95, %v151
    %v159 = vmul.f32 %v100, %v151
    %v160 = vmul.f32 %v105, %v151
    %v161 = vmul.f32 %v110, %v151
    %v162 = vmul.f32 %v115, %v151
    %v163 = vmul.f32 %v120, %v151
    %v164 = vmul.f32 %v125, %v151
    %v165 = vmul.f32 %v130, %v151
    %v166 = vmul.f32 %v135, %v151
    %v167 = vmul.f32 %v140, %v151
    %v168 = vmul.f32 %v145, %v151
    %v169 = vld [vmem:[%s1] sm:$0xff]
    %v170 = vld [vmem:[%s1 + $0x8] sm:$0xff]
    %v171 = vld [vmem:[%s1 + $0x10] sm:$0xff]
    %v172 = vld [vmem:[%s1 + $0x18] sm:$0xff]
    %v173 = vld [vmem:[%s1 + $0x20] sm:$0xff]
    %v174 = vld [vmem:[%s1 + $0x28] sm:$0xff]
    %v175 = vld [vmem:[%s1 + $0x30] sm:$0xff]
    %v176 = vld [vmem:[%s1 + $0x38] sm:$0xff]
    %v177 = vld [vmem:[%s1 + $0x40] sm:$0xff]
    %v178 = vld [vmem:[%s1 + $0x48] sm:$0xff]
    %v179 = vld [vmem:[%s1 + $0x50] sm:$0xff]
    %v180 = vld [vmem:[%s1 + $0x58] sm:$0xff]
    %v181 = vld [vmem:[%s1 + $0x60] sm:$0xff]
    %v182 = vld [vmem:[%s1 + $0x68] sm:$0xff]
    %v183 = vld [vmem:[%s1 + $0x70] sm:$0xff]
    %v184 = vld [vmem:[%s1 + $0x78] sm:$0xff]
    %v185 = vld [vmem:[#allocation5] sm:$0xff]
    %v186 = vld [vmem:[#allocation5 + $0x8] sm:$0xff]
    %v187 = vld [vmem:[#allocation5 + $0x10] sm:$0xff]
    %v188 = vld [vmem:[#allocation5 + $0x18] sm:$0xff]
    %v189 = vld [vmem:[#allocation5 + $0x20] sm:$0xff]
    %v190 = vld [vmem:[#allocation5 + $0x28] sm:$0xff]
    %v191 = vld [vmem:[#allocation5 + $0x30] sm:$0xff]
    %v192 = vld [vmem:[#allocation5 + $0x38] sm:$0xff]
    %v193 = vld [vmem:[#allocation5 + $0x40] sm:$0xff]
    %v194 = vld [vmem:[#allocation5 + $0x48] sm:$0xff]
    %v195 = vld [vmem:[#allocation5 + $0x50] sm:$0xff]
    %v196 = vld [vmem:[#allocation5 + $0x58] sm:$0xff]
    %v197 = vld [vmem:[#allocation5 + $0x60] sm:$0xff]
    %v198 = vld [vmem:[#allocation5 + $0x68] sm:$0xff]
    %v199 = vld [vmem:[#allocation5 + $0x70] sm:$0xff]
    %v200 = vld [vmem:[#allocation5 + $0x78] sm:$0xff]
    %v201 = vmul.f32 %v185, %v153
    %v202 = vmul.f32 %v186, %v154
    %v203 = vmul.f32 %v187, %v155
    %v204 = vmul.f32 %v188, %v156
    %v205 = vmul.f32 %v189, %v157
    %v206 = vmul.f32 %v190, %v158
    %v207 = vmul.f32 %v191, %v159
    %v208 = vmul.f32 %v192, %v160
    %v209 = vmul.f32 %v193, %v161
    %v210 = vmul.f32 %v194, %v162
    %v211 = vmul.f32 %v195, %v163
    %v212 = vmul.f32 %v196, %v164
    %v213 = vmul.f32 %v197, %v165
    %v214 = vmul.f32 %v198, %v166
    %v215 = vmul.f32 %v199, %v167
    %v216 = vmul.f32 %v200, %v168
    %v217 = vadd.f32 %v169, %v201
    %v218 = vadd.f32 %v170, %v202
    %v219 = vadd.f32 %v171, %v203
    %v220 = vadd.f32 %v172, %v204
    %v221 = vadd.f32 %v173, %v205
    %v222 = vadd.f32 %v174, %v206
    %v223 = vadd.f32 %v175, %v207
    %v224 = vadd.f32 %v176, %v208
    %v225 = vadd.f32 %v177, %v209
    %v226 = vadd.f32 %v178, %v210
    %v227 = vadd.f32 %v179, %v211
    %v228 = vadd.f32 %v180, %v212
    %v229 = vadd.f32 %v181, %v213
    %v230 = vadd.f32 %v182, %v214
    %v231 = vadd.f32 %v183, %v215
    %v232 = vadd.f32 %v184, %v216
    %v233 = vld [vmem:[%s5] sm:$0x3]
    %v234 = vmul.f32 %v233, %v151
    %v236 = vrot.slane %v234, 1
    %v238 = vadd.f32 %v233, %v236
    %v239 = vld [vmem:[#allocation2] sm:$0xff]
    %v240 = vlaneseq
    %v241 = vshrl.u32 %v240, 7
    %v242 = vsub.s32 0, %v241
    %v243 = vrot.slane %v238, %v242
    %244 = vmatprep.subr.mxu0 0.0
    %245 = vmatpush1.msra.mxu0 %v232
    %246 = vmatprep.subr.mxu0 0.0
    %247 = vmatpush1.msra.mxu0 %v231
    %248 = vmatprep.subr.mxu0 0.0
    %249 = vmatpush1.msra.mxu0 %v230
    %250 = vmatprep.subr.mxu0 0.0
    %251 = vmatpush1.msra.mxu0 %v229
    %252 = vmatprep.subr.mxu0 0.0
    %253 = vmatpush1.msra.mxu0 %v228
    %254 = vmatprep.subr.mxu0 0.0
    %255 = vmatpush1.msra.mxu0 %v227
    %256 = vmatprep.subr.mxu0 0.0
    %257 = vmatpush1.msra.mxu0 %v226
    %258 = vmatprep.subr.mxu0 0.0
    %259 = vmatpush1.msra.mxu0 %v225
    %260 = vmatprep.subr.mxu0 0.0
    %261 = vmatpush1.msra.mxu0 %v224
    %262 = vmatprep.subr.mxu0 0.0
    %263 = vmatpush1.msra.mxu0 %v223
    %264 = vmatprep.subr.mxu0 0.0
    %265 = vmatpush1.msra.mxu0 %v222
    %266 = vmatprep.subr.mxu0 0.0
    %267 = vmatpush1.msra.mxu0 %v221
    %268 = vmatprep.subr.mxu0 0.0
    %269 = vmatpush1.msra.mxu0 %v220
    %270 = vmatprep.subr.mxu0 0.0
    %271 = vmatpush1.msra.mxu0 %v219
    %272 = vmatprep.subr.mxu0 0.0
    %273 = vmatpush1.msra.mxu0 %v218
    %274 = vmatprep.subr.mxu0 0.0
    %275 = vmatpush1.msra.mxu0 %v217
    %276 = vmatprep.subr.mxu0 0.0
    %277 = vmatpush2.msra.mxu0 0.0
    %278 = vmatprep.subr.mxu0 0.0
    %279 = vmatpush2.msra.mxu0 0.0
    %280 = vmatprep.subr.mxu0 0.0
    %281 = vmatpush2.msra.mxu0 0.0
    %282 = vmatprep.subr.mxu0 0.0
    %283 = vmatpush2.msra.mxu0 0.0
    %284 = vmatprep.subr.mxu0 0.0
    %285 = vmatpush2.msra.mxu0 0.0
    %286 = vmatprep.subr.mxu0 0.0
    %287 = vmatpush2.msra.mxu0 0.0
    %288 = vmatprep.subr.mxu0 0.0
    %289 = vmatpush2.msra.mxu0 0.0
    %290 = vmatprep.subr.mxu0 0.0
    %291 = vmatpush2.msra.mxu0 0.0
    %292 = vmatprep.subr.mxu0 0.0
    %293 = vmatpush2.msra.mxu0 0.0
    %294 = vmatprep.subr.mxu0 0.0
    %295 = vmatpush2.msra.mxu0 0.0
    %296 = vmatprep.subr.mxu0 0.0
    %297 = vmatpush2.msra.mxu0 0.0
    %298 = vmatprep.subr.mxu0 0.0
    %299 = vmatpush2.msra.mxu0 0.0
    %300 = vmatprep.subr.mxu0 0.0
    %301 = vmatpush2.msra.mxu0 0.0
    %302 = vmatprep.subr.mxu0 0.0
    %303 = vmatpush2.msra.mxu0 0.0
    %304 = vmatprep.subr.mxu0 0.0
    %305 = vmatpush2.msra.mxu0 0.0
    %306 = vmatprep.subr.mxu0 0.0
    %307 = vmatpush2.msra.mxu0 0.0
    %308 = vmatprep.mubr.f32.mxu0 0.0
    %309 = vmatmul.mubr.f32.gmra.mxu0 %v239
    %v310 = vpop.f32.mrf.mxu0
    %v311 = vadd.f32 %v243, %v310
    %v312 = vpop.f32.mrf.mxu0
    %313 = vdwg.mxu0
    %314 = vst [vmem:[#allocation7] sm:$0xff] %v311
    // Predicated region
    $region34: #{tpu_custom_call.1} parent=1 // pred_check
      _
    $region35: #{tpu_custom_call.1} parent=1 // pred_check_branch
      %316 = sbr.rel (0) target = $region37
    $region36: #{tpu_custom_call.1} parent=1 // pred_region
      %s318 = ssub.s32 128, 128
      %319 = vsyncadd [#allocation4], %s318
      %s321 = sshll.u32 [#allocation7], 4
      %s322 = int_to_ptr.vmem [resolvable:$true] %s321
      %324 = dma.vmem_to_hbm [thread:$0]  %s322, 128, %s6, [#allocation4]
    $region37: #{tpu_custom_call.1} parent=1 // pred_fallthru
      _
    // Predicated region
    $region38: #{tpu_custom_call.1} parent=1 // pred_check
      _
    $region39: #{tpu_custom_call.1} parent=1 // pred_check_branch
      %326 = sbr.rel (0) target = $region41
    $region40: #{tpu_custom_call.1} parent=1 // pred_region
      %327 = dma.done [#allocation4], 128
    $region41: #{tpu_custom_call.1} parent=1 // pred_fallthru
      _
    %328 = vsyncpa [#allocation3], 1
    %329 = vsyncpa [#allocation6], 1
    %330 = vsyncpa [#allocation4], 1

</llo_original>
